<compile_context>
chip_gen: v7x
topology: tpu7x:2x2x1
jax: 0.10.0
libtpu: 0.0.40
codegen_flags: <defaults>
</compile_context>

<pallas_src>
import functools

import jax
import jax.numpy as jnp
from jax.experimental import pallas as pl
from jax.experimental.pallas import tpu as pltpu


def _round_up(x: int, m: int) -> int:
    return ((x + m - 1) // m) * m


# --------------------------------------------------------------------------
# Kernel
# --------------------------------------------------------------------------
def _qfunction_kernel(obs_ref, act_ref, w1o_ref, w1a_ref, b1_ref,
                      w2_ref, b2_ref, w3_ref, b3_ref, out_ref):
    """3-layer MLP hot path: bf16 MXU matmuls, f32 bias/ReLU, lane-dense out."""
    cdt = w2_ref.dtype                                  # compute dtype (bf16)
    obs = obs_ref[...].astype(cdt)                      # in-kernel cast (VPU)
    act = act_ref[...].astype(cdt)

    # Layer 1: concat([obs, act]) @ W1  ==  obs @ W1_obs + act @ W1_act
    # (two tiny-K MXU pushes; negligible next to the h_p x h_p layer 2).
    h1 = jnp.dot(obs, w1o_ref[...], preferred_element_type=jnp.float32)
    h1 = h1 + jnp.dot(act, w1a_ref[...], preferred_element_type=jnp.float32)
    h1 = jnp.maximum(h1 + b1_ref[...], 0.0).astype(cdt)   # f32 bias/ReLU

    # Layer 2: Linear(hidden, hidden) + ReLU
    h2 = jnp.dot(h1, w2_ref[...], preferred_element_type=jnp.float32)
    h2 = jnp.maximum(h2 + b2_ref[...], 0.0).astype(cdt)

    # Layer 3: Linear(hidden, 1), head zero-padded to 128 lanes -> unmasked vst
    q = jnp.dot(h2, w3_ref[...], preferred_element_type=jnp.float32)
    out_ref[...] = (q + b3_ref[...]).astype(out_ref.dtype)


# --------------------------------------------------------------------------
# One-time parameter prep (padding / casting; never on the per-call path)
# --------------------------------------------------------------------------
def prepare_qfunction_params(params, obs_dim, action_dim,
                             compute_dtype=jnp.bfloat16, lane=128):
    """Pad / cast raw (torch-layout) params for the kernel.

    Weights are stored (in_features, out_features) so the kernel computes
    y = x @ W + b.  Zero padding of hidden / head columns keeps the math
    exact through ReLU; bf16 weight casts match the MXU's native input dtype
    (f32 accumulation is kept in-kernel).  W1 is split into its obs-rows and
    action-rows so the kernel can consume obs/action without a wrapper concat.
    """
    hidden = params["w2"].shape[0]
    h_p = _round_up(hidden, lane)
    out_p = lane                      # 1-wide Q head padded to a full lane tile

    def pad_w(w, rows, cols):
        out = jnp.zeros((rows, cols), compute_dtype)
        return out.at[:w.shape[0], :w.shape[1]].set(w.astype(compute_dtype))

    def pad_b(b, cols):
        out = jnp.zeros((1, cols), jnp.float32)
        return out.at[0, :b.shape[0]].set(b.astype(jnp.float32))

    w1 = params["w1"]
    assert w1.shape[0] == obs_dim + action_dim
    return {
        "w1_obs": pad_w(w1[:obs_dim], obs_dim, h_p),
        "w1_act": pad_w(w1[obs_dim:], action_dim, h_p),
        "b1": pad_b(params["b1"], h_p),
        "w2": pad_w(params["w2"], h_p, h_p),
        "b2": pad_b(params["b2"], h_p),
        "w3": pad_w(params["w3"], h_p, out_p),
        "b3": pad_b(params["b3"], out_p),
    }


# --------------------------------------------------------------------------
# Tiling / VMEM heuristics
# --------------------------------------------------------------------------
def _choose_bm(batch, block_batch, min_bm=16, max_waste=0.25):
    """Batch tile: >=16 (bf16 sublane packing), grown to fill the MXU M dim,
    capped so batch >= 256 yields >= 2 parallel grid steps (v7x dual-TC), and
    chosen to avoid heavy over-padding of awkward batch sizes."""
    if batch <= min_bm:
        return min_bm
    cap = min(block_batch, _round_up(batch, min_bm))
    if batch >= 256:
        # Keep at least 2 grid steps so both v7x TensorCores get work.
        cap = min(cap, _round_up(pl.cdiv(batch, 2), min_bm))
    cap = max(cap, min_bm)
    best = min_bm
    for bm in range(min_bm, cap + 1, min_bm):
        batch_p = _round_up(batch, bm)
        if (batch_p - batch) / batch_p <= max_waste:
            best = bm          # largest acceptable tile wins
    return best


def _vmem_budget_bytes(bm, obs_dim, action_dim, h_p, out_p, lane=128):
    """Explicit scoped-VMEM request: resident (single-buffered) weights +
    double-buffered activation/output tiles + f32 intermediates + headroom."""
    f32, bf16 = 4, 2
    weights = h_p * (obs_dim + action_dim + h_p + out_p) * bf16
    biases = (2 * h_p + out_p) * 8 * f32            # (1,N) tiles pad to 8 rows
    acts = 2 * bm * (_round_up(obs_dim, lane) + _round_up(action_dim, lane)) * f32
    outs = 2 * bm * out_p * f32
    inter = 2 * bm * h_p * (f32 + bf16)             # h1/h2 f32 + bf16 copies
    total = weights + biases + acts + outs + inter
    return max(32 << 20, min(int(total * 1.5) + (8 << 20), 60 << 20))


def _resident_spec(shape):
    """Constant-index (weights-resident) block: never re-DMA'd across grid
    steps, so single-buffer it to halve its VMEM footprint."""
    return pl.BlockSpec(shape, lambda *_: (0, 0), pipeline_mode=pl.Buffered(1))


# --------------------------------------------------------------------------
# Forward wrapper
# --------------------------------------------------------------------------
@functools.partial(jax.jit, static_argnames=("block_batch",))
def qfunction_forward(obs, action, prepped, block_batch=256):
    """Q(obs, action) via the Pallas kernel. Returns (batch, 1) float32.

    block_batch=512 is a reasonable choice on v6e for large training batches
    (single TC, plenty of VMEM); 256 is the safe default across chips.
    """
    assert obs.shape[0] == action.shape[0]
    batch, obs_dim = obs.shape
    action_dim = action.shape[1]

    w1o, w1a = prepped["w1_obs"], prepped["w1_act"]
    b1, w2, b2, w3, b3 = (prepped[k] for k in ("b1", "w2", "b2", "w3", "b3"))
    assert w1o.shape[0] == obs_dim and w1a.shape[0] == action_dim
    h_p = w2.shape[0]
    out_p = w3.shape[1]

    bm = _choose_bm(batch, block_batch)
    batch_p = _round_up(batch, bm)
    if batch_p != batch:   # only touches misaligned batches; exact (rows sliced off)
        obs = jnp.pad(obs, ((0, batch_p - batch), (0, 0)))
        action = jnp.pad(action, ((0, batch_p - batch), (0, 0)))

    out = pl.pallas_call(
        _qfunction_kernel,
        out_shape=jax.ShapeDtypeStruct((batch_p, out_p), jnp.float32),
        grid=(batch_p // bm,),
        in_specs=[
            pl.BlockSpec((bm, obs_dim), lambda i: (i, 0)),     # pipelined
            pl.BlockSpec((bm, action_dim), lambda i: (i, 0)),  # pipelined
            _resident_spec(w1o.shape),
            _resident_spec(w1a.shape),
            _resident_spec(b1.shape),
            _resident_spec(w2.shape),
            _resident_spec(b2.shape),
            _resident_spec(w3.shape),
            _resident_spec(b3.shape),
        ],
        out_specs=pl.BlockSpec((bm, out_p), lambda i: (i, 0)),
        compiler_params=pltpu.CompilerParams(
            dimension_semantics=("parallel",),
            vmem_limit_bytes=_vmem_budget_bytes(
                bm, obs_dim, action_dim, h_p, out_p)),
    )(obs, action, w1o, w1a, b1, w2, b2, w3, b3)

    # Drop batch padding; only column 0 of the lane-padded head is real.
    return out[:batch, :1]


# --------------------------------------------------------------------------
# Init + pure-JAX reference (PyTorch-equivalent forward)
# --------------------------------------------------------------------------
def init_qfunction_params(key, obs_dim, action_dim, hidden_dim):
    """torch.nn.Linear-style init; weights stored (in_features, out_features)."""
    def linear(k, fan_in, fan_out):
        kw, kb = jax.random.split(k)
        bound = 1.0 / (fan_in ** 0.5)
        w = jax.random.uniform(kw, (fan_in, fan_out), jnp.float32, -bound, bound)
        b = jax.random.uniform(kb, (fan_out,), jnp.float32, -bound, bound)
        return w, b

    k1, k2, k3 = jax.random.split(key, 3)
    w1, b1 = linear(k1, obs_dim + action_dim, hidden_dim)
    w2, b2 = linear(k2, hidden_dim, hidden_dim)
    w3, b3 = linear(k3, hidden_dim, 1)
    return {"w1": w1, "b1": b1, "w2": w2, "b2": b2, "w3": w3, "b3": b3}


def qfunction_reference(obs, action, params, compute_dtype=jnp.float32):
    """Plain-JAX reference of the PyTorch forward pass.  With
    compute_dtype=bfloat16 it emulates the kernel's bf16-input /
    f32-accumulate matmuls (same cast points)."""
    c = lambda a: a.astype(compute_dtype)
    x = jnp.concatenate([obs, action], axis=1)
    h1 = jnp.maximum(
        jnp.dot(c(x), c(params["w1"]), preferred_element_type=jnp.float32)
        + params["b1"], 0.0)
    h2 = jnp.maximum(
        jnp.dot(c(h1), c(params["w2"]), preferred_element_type=jnp.float32)
        + params["b2"], 0.0)
    return (jnp.dot(c(h2), c(params["w3"]), preferred_element_type=jnp.float32)
            + params["b3"])


if __name__ == "__main__":
    # Small shapes consistent with QFunction(obs_dim, action_dim, hidden_dim).
    batch, obs_dim, action_dim, hidden_dim = 2, 16, 4, 32

    key = jax.random.PRNGKey(0)
    k_obs, k_act, k_par = jax.random.split(key, 3)

    obs = jax.random.normal(k_obs, (batch, obs_dim), jnp.float32)
    action = jax.random.normal(k_act, (batch, action_dim), jnp.float32)
    params = init_qfunction_params(k_par, obs_dim, action_dim, hidden_dim)

    # One-time param prep (padding / bf16 cast); reused by every forward call.
    prepped = prepare_qfunction_params(params, obs_dim, action_dim)

    q = qfunction_forward(obs, action, prepped)
    q = jax.block_until_ready(q)
    assert q.shape == (batch, 1), q.shape

    # Tight check vs a reference that emulates the kernel's bf16 matmul inputs.
    q_bf16_ref = qfunction_reference(obs, action, params, jnp.bfloat16)
    assert jnp.allclose(q, q_bf16_ref, atol=2e-3, rtol=2e-3), (q, q_bf16_ref)

    # Semantics check vs the full-f32 PyTorch-equivalent math (loose tolerance
    # accounts only for bf16 weight/activation quantization).
    q_f32_ref = qfunction_reference(obs, action, params, jnp.float32)
    assert jnp.allclose(q, q_f32_ref, atol=1e-1, rtol=1e-1), (q, q_f32_ref)

    print("KERNEL_OK")
</pallas_src>

<mosaic_0001>
module attributes {stable_mosaic.version = 11 : i64} {
  func.func @_qfunction_kernel(%arg0: i32, %arg1: memref<16x16xf32, #tpu.memory_space<vmem>>, %arg2: memref<16x4xf32, #tpu.memory_space<vmem>>, %arg3: memref<16x128xbf16, #tpu.memory_space<vmem>>, %arg4: memref<4x128xbf16, #tpu.memory_space<vmem>>, %arg5: memref<1x128xf32, #tpu.memory_space<vmem>>, %arg6: memref<128x128xbf16, #tpu.memory_space<vmem>>, %arg7: memref<1x128xf32, #tpu.memory_space<vmem>>, %arg8: memref<128x128xbf16, #tpu.memory_space<vmem>>, %arg9: memref<1x128xf32, #tpu.memory_space<vmem>>, %arg10: memref<16x128xf32, #tpu.memory_space<vmem>>) attributes {dimension_semantics = [#tpu.dimension_semantics<parallel>], iteration_bounds = array<i64: 1>, scalar_prefetch = 0 : i64, scratch_operands = 0 : i64, tpu.core_type = #tpu.core_type<tc>, window_params = [{transform_indices = @transform_0, window_bounds = array<i64: 16, 16>}, {transform_indices = @transform_1, window_bounds = array<i64: 16, 4>}, {pipeline_mode = #tpu.pipeline_mode<synchronous>, transform_indices = @transform_2, window_bounds = array<i64: 16, 128>}, {pipeline_mode = #tpu.pipeline_mode<synchronous>, transform_indices = @transform_3, window_bounds = array<i64: 4, 128>}, {pipeline_mode = #tpu.pipeline_mode<synchronous>, transform_indices = @transform_4, window_bounds = array<i64: 1, 128>}, {pipeline_mode = #tpu.pipeline_mode<synchronous>, transform_indices = @transform_5, window_bounds = array<i64: 128, 128>}, {pipeline_mode = #tpu.pipeline_mode<synchronous>, transform_indices = @transform_6, window_bounds = array<i64: 1, 128>}, {pipeline_mode = #tpu.pipeline_mode<synchronous>, transform_indices = @transform_7, window_bounds = array<i64: 128, 128>}, {pipeline_mode = #tpu.pipeline_mode<synchronous>, transform_indices = @transform_8, window_bounds = array<i64: 1, 128>}, {transform_indices = @transform_9, window_bounds = array<i64: 16, 128>}]} {
    %c0 = arith.constant 0 : index
    %c0_0 = arith.constant 0 : index
    %0 = vector.load %arg1[%c0, %c0_0] : memref<16x16xf32, #tpu.memory_space<vmem>>, vector<16x16xf32>
    %1 = arith.truncf %0 : vector<16x16xf32> to vector<16x16xbf16>
    %c0_1 = arith.constant 0 : index
    %c0_2 = arith.constant 0 : index
    %2 = vector.load %arg2[%c0_1, %c0_2] : memref<16x4xf32, #tpu.memory_space<vmem>>, vector<16x4xf32>
    %3 = arith.truncf %2 : vector<16x4xf32> to vector<16x4xbf16>
    %c0_3 = arith.constant 0 : index
    %c0_4 = arith.constant 0 : index
    %4 = vector.load %arg3[%c0_3, %c0_4] : memref<16x128xbf16, #tpu.memory_space<vmem>>, vector<16x128xbf16>
    %cst = arith.constant dense<0.000000e+00> : vector<16x128xf32>
    %5 = tpu.matmul %1, %4, %cst {dimension_numbers = #tpu.dot_dimension_numbers<[1], [0], [0], [1], [0, 0, 1, 1], [], []>} : vector<16x16xbf16>, vector<16x128xbf16>, vector<16x128xf32> -> vector<16x128xf32>
    %c0_5 = arith.constant 0 : index
    %c0_6 = arith.constant 0 : index
    %6 = vector.load %arg4[%c0_5, %c0_6] : memref<4x128xbf16, #tpu.memory_space<vmem>>, vector<4x128xbf16>
    %cst_7 = arith.constant dense<0.000000e+00> : vector<16x128xf32>
    %7 = tpu.matmul %3, %6, %cst_7 {dimension_numbers = #tpu.dot_dimension_numbers<[1], [0], [0], [1], [0, 0, 1, 1], [], []>} : vector<16x4xbf16>, vector<4x128xbf16>, vector<16x128xf32> -> vector<16x128xf32>
    %8 = arith.addf %5, %7 : vector<16x128xf32>
    %c0_8 = arith.constant 0 : index
    %c0_9 = arith.constant 0 : index
    %9 = vector.load %arg5[%c0_8, %c0_9] : memref<1x128xf32, #tpu.memory_space<vmem>>, vector<1x128xf32>
    %10 = vector.broadcast %9 : vector<1x128xf32> to vector<16x128xf32>
    %11 = arith.addf %8, %10 : vector<16x128xf32>
    %cst_10 = arith.constant 0.000000e+00 : f32
    %12 = vector.broadcast %cst_10 : f32 to vector<16x128xf32>
    %13 = arith.maximumf %11, %12 : vector<16x128xf32>
    %14 = arith.truncf %13 : vector<16x128xf32> to vector<16x128xbf16>
    %c0_11 = arith.constant 0 : index
    %c0_12 = arith.constant 0 : index
    %15 = vector.load %arg6[%c0_11, %c0_12] : memref<128x128xbf16, #tpu.memory_space<vmem>>, vector<128x128xbf16>
    %cst_13 = arith.constant dense<0.000000e+00> : vector<16x128xf32>
    %16 = tpu.matmul %14, %15, %cst_13 {dimension_numbers = #tpu.dot_dimension_numbers<[1], [0], [0], [1], [0, 0, 1, 1], [], []>} : vector<16x128xbf16>, vector<128x128xbf16>, vector<16x128xf32> -> vector<16x128xf32>
    %c0_14 = arith.constant 0 : index
    %c0_15 = arith.constant 0 : index
    %17 = vector.load %arg7[%c0_14, %c0_15] : memref<1x128xf32, #tpu.memory_space<vmem>>, vector<1x128xf32>
    %18 = vector.broadcast %17 : vector<1x128xf32> to vector<16x128xf32>
    %19 = arith.addf %16, %18 : vector<16x128xf32>
    %cst_16 = arith.constant 0.000000e+00 : f32
    %20 = vector.broadcast %cst_16 : f32 to vector<16x128xf32>
    %21 = arith.maximumf %19, %20 : vector<16x128xf32>
    %22 = arith.truncf %21 : vector<16x128xf32> to vector<16x128xbf16>
    %c0_17 = arith.constant 0 : index
    %c0_18 = arith.constant 0 : index
    %23 = vector.load %arg8[%c0_17, %c0_18] : memref<128x128xbf16, #tpu.memory_space<vmem>>, vector<128x128xbf16>
    %cst_19 = arith.constant dense<0.000000e+00> : vector<16x128xf32>
    %24 = tpu.matmul %22, %23, %cst_19 {dimension_numbers = #tpu.dot_dimension_numbers<[1], [0], [0], [1], [0, 0, 1, 1], [], []>} : vector<16x128xbf16>, vector<128x128xbf16>, vector<16x128xf32> -> vector<16x128xf32>
    %c0_20 = arith.constant 0 : index
    %c0_21 = arith.constant 0 : index
    %25 = vector.load %arg9[%c0_20, %c0_21] : memref<1x128xf32, #tpu.memory_space<vmem>>, vector<1x128xf32>
    %26 = vector.broadcast %25 : vector<1x128xf32> to vector<16x128xf32>
    %27 = arith.addf %24, %26 : vector<16x128xf32>
    %c0_22 = arith.constant 0 : index
    %c0_23 = arith.constant 0 : index
    %28 = vector.load %arg10[%c0_22, %c0_23] : memref<16x128xf32, #tpu.memory_space<vmem>>, vector<16x128xf32>
    tpu.vector_store %arg10[%c0_22, %c0_23], %27 {strides = array<i32>} : memref<16x128xf32, #tpu.memory_space<vmem>>, vector<16x128xf32>,
    return
  }
  func.func @transform_0(%arg0: i32) -> (i32, i32) {
    %c0_i32 = arith.constant 0 : i32
    %c0_i32_0 = arith.constant 0 : i32
    return %arg0, %c0_i32 : i32, i32
  }
  func.func @transform_1(%arg0: i32) -> (i32, i32) {
    %c0_i32 = arith.constant 0 : i32
    %c0_i32_0 = arith.constant 0 : i32
    return %arg0, %c0_i32 : i32, i32
  }
  func.func @transform_2(%arg0: i32) -> (i32, i32) {
    %c0_i32 = arith.constant 0 : i32
    %c0_i32_0 = arith.constant 0 : i32
    %c0_i32_1 = arith.constant 0 : i32
    return %c0_i32, %c0_i32_0 : i32, i32
  }
  func.func @transform_3(%arg0: i32) -> (i32, i32) {
    %c0_i32 = arith.constant 0 : i32
    %c0_i32_0 = arith.constant 0 : i32
    %c0_i32_1 = arith.constant 0 : i32
    return %c0_i32, %c0_i32_0 : i32, i32
  }
  func.func @transform_4(%arg0: i32) -> (i32, i32) {
    %c0_i32 = arith.constant 0 : i32
    %c0_i32_0 = arith.constant 0 : i32
    %c0_i32_1 = arith.constant 0 : i32
    return %c0_i32, %c0_i32_0 : i32, i32
  }
  func.func @transform_5(%arg0: i32) -> (i32, i32) {
    %c0_i32 = arith.constant 0 : i32
    %c0_i32_0 = arith.constant 0 : i32
    %c0_i32_1 = arith.constant 0 : i32
    return %c0_i32, %c0_i32_0 : i32, i32
  }
  func.func @transform_6(%arg0: i32) -> (i32, i32) {
    %c0_i32 = arith.constant 0 : i32
    %c0_i32_0 = arith.constant 0 : i32
    %c0_i32_1 = arith.constant 0 : i32
    return %c0_i32, %c0_i32_0 : i32, i32
  }
  func.func @transform_7(%arg0: i32) -> (i32, i32) {
    %c0_i32 = arith.constant 0 : i32
    %c0_i32_0 = arith.constant 0 : i32
    %c0_i32_1 = arith.constant 0 : i32
    return %c0_i32, %c0_i32_0 : i32, i32
  }
  func.func @transform_8(%arg0: i32) -> (i32, i32) {
    %c0_i32 = arith.constant 0 : i32
    %c0_i32_0 = arith.constant 0 : i32
    %c0_i32_1 = arith.constant 0 : i32
    return %c0_i32, %c0_i32_0 : i32, i32
  }
  func.func @transform_9(%arg0: i32) -> (i32, i32) {
    %c0_i32 = arith.constant 0 : i32
    %c0_i32_0 = arith.constant 0 : i32
    return %arg0, %c0_i32 : i32, i32
  }
}

</mosaic_0001>

<llo_original>
// kernel: qfunction_forward.1
$region0: #{qfunction_forward.1}
  #allocation0 [shape = 'u32[]', space=smem, size = 0x4, offset = 0x4, fixed_abs, tag = 'smem constant byte address 0x4 - core index']
  #allocation1 [shape = 'u32[144,128]{1,0:T(1,128)}', space=vmem, size = 0x12000, scoped, tag = 'internal scratch']
  %s0 = inlined_call_operand.vmem [shape: f32[16,16], index: 0, kind: input, shape index: {}]
  %s1 = inlined_call_operand.vmem [shape: f32[16,4], index: 1, kind: input, shape index: {}]
  %s2 = inlined_call_operand.hbm [shape: bf16[16,128], index: 2, kind: input, shape index: {}]
  %s3 = inlined_call_operand.hbm [shape: bf16[4,128], index: 3, kind: input, shape index: {}]
  %s4 = inlined_call_operand.hbm [shape: f32[1,128], index: 4, kind: input, shape index: {}]
  %s5 = inlined_call_operand.vmem [shape: bf16[128,128], index: 5, kind: input, shape index: {}]
  %s6 = inlined_call_operand.hbm [shape: f32[1,128], index: 6, kind: input, shape index: {}]
  %s7 = inlined_call_operand.hbm [shape: bf16[128,128], index: 7, kind: input, shape index: {}]
  %s8 = inlined_call_operand.hbm [shape: f32[1,128], index: 8, kind: input, shape index: {}]
  %s9 = inlined_call_operand.vmem [shape: f32[16,128], index: 9, kind: output, shape index: {}]
  %s10 = sld [smem:[#allocation0]]
  $region70: #{qfunction_forward.1} parent=0
    _
  %s12 = ssub.s32 1, %s10
  %s13 = scalar_select 0, %s12, %s10
  $region1: #{qfunction_forward.1} parent=0
    #allocation2 [shape = 'u8[4096]{0}', space=vmem, size = 0x1000, scoped, tag = 'input window, operand 2, single buffered']
    #allocation3 [shape = 's32[1]{0}', space=sflag, size = 0x4, scoped, tag = 'scoped memory for qfunction_forward.1']
    #allocation4 [shape = 'u8[1024]{0}', space=vmem, size = 0x400, scoped, tag = 'input window, operand 3, single buffered']
    #allocation5 [shape = 's32[1]{0}', space=sflag, size = 0x4, scoped, tag = 'scoped memory for qfunction_forward.1']
    #allocation6 [shape = 'u8[512]{0}', space=vmem, size = 0x400, scoped, tag = 'input window, operand 4, single buffered']
    #allocation7 [shape = 'u8[512]{0}', space=vmem, size = 0x400, scoped, tag = 'input window, operand 6, single buffered']
    #allocation8 [shape = 's32[1]{0}', space=sflag, size = 0x4, scoped, tag = 'scoped memory for qfunction_forward.1']
    #allocation9 [shape = 'u8[32768]{0}', space=vmem, size = 0x8000, scoped, tag = 'input window, operand 7, single buffered']
    #allocation10 [shape = 'u8[512]{0}', space=vmem, size = 0x400, scoped, tag = 'input window, operand 8, single buffered']
    #allocation11 [shape = 's32[1]{0}', space=sflag, size = 0x4, scoped, tag = 'scoped memory for qfunction_forward.1']
    %14 = vsyncpa [#allocation3], 0
    %15 = vsyncpa [#allocation5], 0
    %16 = vsyncpa [#allocation8], 0
    %17 = vsyncpa [#allocation11], 0
    // Predicated region
    $region2: #{qfunction_forward.1} parent=1 // pred_check
      _
    $region3: #{qfunction_forward.1} parent=1 // pred_check_branch
      %19 = sbr.rel (0) target = $region5
    $region4: #{qfunction_forward.1} parent=1 // pred_region
      _
    $region5: #{qfunction_forward.1} parent=1 // pred_fallthru
      _
    // Predicated region
    $region6: #{qfunction_forward.1} parent=1 // pred_check
      _
    $region7: #{qfunction_forward.1} parent=1 // pred_check_branch
      %21 = sbr.rel (0) target = $region9
    $region8: #{qfunction_forward.1} parent=1 // pred_region
      _
    $region9: #{qfunction_forward.1} parent=1 // pred_fallthru
      _
    // Predicated region
    $region10: #{qfunction_forward.1} parent=1 // pred_check
      _
    $region11: #{qfunction_forward.1} parent=1 // pred_check_branch
      %23 = sbr.rel (0) target = $region13
    $region12: #{qfunction_forward.1} parent=1 // pred_region
      %s25 = ssub.s32 128, 128
      %26 = vsyncadd [#allocation3], %s25
      %s27 = sshll.u32 [#allocation2], 4
      %s28 = int_to_ptr.vmem [resolvable:$true] %s27
      %33 = dma.hbm_to_vmem [thread:$0]  %s2, 128, %s28, [#allocation3], 64, 64, 4
    $region13: #{qfunction_forward.1} parent=1 // pred_fallthru
      _
    // Predicated region
    $region14: #{qfunction_forward.1} parent=1 // pred_check
      _
    $region15: #{qfunction_forward.1} parent=1 // pred_check_branch
      %35 = sbr.rel (0) target = $region17
    $region16: #{qfunction_forward.1} parent=1 // pred_region
      %s37 = ssub.s32 32, 32
      %38 = vsyncadd [#allocation5], %s37
      %s40 = sshll.u32 [#allocation4], 4
      %s41 = int_to_ptr.vmem [resolvable:$true] %s40
      %43 = dma.hbm_to_vmem [thread:$0]  %s3, 32, %s41, [#allocation5]
    $region17: #{qfunction_forward.1} parent=1 // pred_fallthru
      _
    // Predicated region
    $region18: #{qfunction_forward.1} parent=1 // pred_check
      _
    $region19: #{qfunction_forward.1} parent=1 // pred_check_branch
      %45 = sbr.rel (0) target = $region21
    $region20: #{qfunction_forward.1} parent=1 // pred_region
      %s47 = ssub.s32 16, 16
      %48 = vsyncadd [#allocation5], %s47
      %s50 = sshll.u32 [#allocation6], 4
      %s51 = int_to_ptr.vmem [resolvable:$true] %s50
      %53 = dma.hbm_to_vmem [thread:$0]  %s4, 16, %s51, [#allocation5]
    $region21: #{qfunction_forward.1} parent=1 // pred_fallthru
      _
    // Predicated region
    $region22: #{qfunction_forward.1} parent=1 // pred_check
      _
    $region23: #{qfunction_forward.1} parent=1 // pred_check_branch
      %55 = sbr.rel (0) target = $region25
    $region24: #{qfunction_forward.1} parent=1 // pred_region
      _
    $region25: #{qfunction_forward.1} parent=1 // pred_fallthru
      _
    // Predicated region
    $region26: #{qfunction_forward.1} parent=1 // pred_check
      _
    $region27: #{qfunction_forward.1} parent=1 // pred_check_branch
      %57 = sbr.rel (0) target = $region29
    $region28: #{qfunction_forward.1} parent=1 // pred_region
      %s59 = ssub.s32 16, 16
      %60 = vsyncadd [#allocation8], %s59
      %s62 = sshll.u32 [#allocation7], 4
      %s63 = int_to_ptr.vmem [resolvable:$true] %s62
      %65 = dma.hbm_to_vmem [thread:$0]  %s6, 16, %s63, [#allocation8]
    $region29: #{qfunction_forward.1} parent=1 // pred_fallthru
      _
    // Predicated region
    $region30: #{qfunction_forward.1} parent=1 // pred_check
      _
    $region31: #{qfunction_forward.1} parent=1 // pred_check_branch
      %67 = sbr.rel (0) target = $region33
    $region32: #{qfunction_forward.1} parent=1 // pred_region
      %s69 = ssub.s32 1024, 1024
      %70 = vsyncadd [#allocation8], %s69
      %s71 = sshll.u32 [#allocation9], 4
      %s72 = int_to_ptr.vmem [resolvable:$true] %s71
      %77 = dma.hbm_to_vmem [thread:$0]  %s7, 1024, %s72, [#allocation8], 64, 64, 4
    $region33: #{qfunction_forward.1} parent=1 // pred_fallthru
      _
    // Predicated region
    $region34: #{qfunction_forward.1} parent=1 // pred_check
      _
    $region35: #{qfunction_forward.1} parent=1 // pred_check_branch
      %79 = sbr.rel (0) target = $region37
    $region36: #{qfunction_forward.1} parent=1 // pred_region
      %s81 = ssub.s32 16, 16
      %82 = vsyncadd [#allocation11], %s81
      %s84 = sshll.u32 [#allocation10], 4
      %s85 = int_to_ptr.vmem [resolvable:$true] %s84
      %87 = dma.hbm_to_vmem [thread:$0]  %s8, 16, %s85, [#allocation11]
    $region37: #{qfunction_forward.1} parent=1 // pred_fallthru
      _
    // Predicated region
    $region38: #{qfunction_forward.1} parent=1 // pred_check
      _
    $region39: #{qfunction_forward.1} parent=1 // pred_check_branch
      %89 = sbr.rel (0) target = $region41
    $region40: #{qfunction_forward.1} parent=1 // pred_region
      %90 = dma.done [#allocation3], 128
    $region41: #{qfunction_forward.1} parent=1 // pred_fallthru
      _
    // Predicated region
    $region42: #{qfunction_forward.1} parent=1 // pred_check
      _
    $region43: #{qfunction_forward.1} parent=1 // pred_check_branch
      %92 = sbr.rel (0) target = $region45
    $region44: #{qfunction_forward.1} parent=1 // pred_region
      %93 = dma.done [#allocation5], 32
    $region45: #{qfunction_forward.1} parent=1 // pred_fallthru
      _
    // Predicated region
    $region46: #{qfunction_forward.1} parent=1 // pred_check
      _
    $region47: #{qfunction_forward.1} parent=1 // pred_check_branch
      %95 = sbr.rel (0) target = $region49
    $region48: #{qfunction_forward.1} parent=1 // pred_region
      %96 = dma.done [#allocation5], 16
    $region49: #{qfunction_forward.1} parent=1 // pred_fallthru
      _
    // Predicated region
    $region50: #{qfunction_forward.1} parent=1 // pred_check
      _
    $region51: #{qfunction_forward.1} parent=1 // pred_check_branch
      %98 = sbr.rel (0) target = $region53
    $region52: #{qfunction_forward.1} parent=1 // pred_region
      %99 = dma.done [#allocation8], 16
    $region53: #{qfunction_forward.1} parent=1 // pred_fallthru
      _
    // Predicated region
    $region54: #{qfunction_forward.1} parent=1 // pred_check
      _
    $region55: #{qfunction_forward.1} parent=1 // pred_check_branch
      %101 = sbr.rel (0) target = $region57
    $region56: #{qfunction_forward.1} parent=1 // pred_region
      %102 = dma.done [#allocation8], 1024
    $region57: #{qfunction_forward.1} parent=1 // pred_fallthru
      _
    // Predicated region
    $region58: #{qfunction_forward.1} parent=1 // pred_check
      _
    $region59: #{qfunction_forward.1} parent=1 // pred_check_branch
      %104 = sbr.rel (0) target = $region61
    $region60: #{qfunction_forward.1} parent=1 // pred_region
      %105 = dma.done [#allocation11], 16
    $region61: #{qfunction_forward.1} parent=1 // pred_fallthru
      _
    %v107 = vld [vmem:[%s0] sm:$0xff]
    %v108 = vld [vmem:[%s0 + $0x8] sm:$0xff]
    %v109 = vpack.c.bf16 %v108, %v107
    %v110 = vld [vmem:[%s1] sm:$0xff]
    %v111 = vld [vmem:[%s1 + $0x8] sm:$0xff]
    %v112 = vpack.c.bf16 %v111, %v110
    %v113 = vld [vmem:[#allocation2] sm:$0xf]
    %v114 = vld [vmem:[#allocation2 + $0x4] sm:$0xf]
    %v115 = vld [vmem:[#allocation4] sm:$0x3]
    %vm116 = vcmask 31744
    %v118 = vsel %vm116, %v112, 0
    %vm120 = vcmask 1041408
    %v122 = vsel %vm120, %v115, 0
    %124 = vmatprep.subr.bf16.mxu0 0
    %125 = vmatpush1.bf16.msra.mxu0 %v122
    %126 = vmatprep.subr.bf16.mxu0 0
    %127 = vmatpush1.bf16.msra.mxu0 0
    %128 = vmatprep.subr.bf16.mxu0 0
    %129 = vmatpush1.bf16.msra.mxu0 0
    %130 = vmatprep.subr.bf16.mxu0 0
    %131 = vmatpush1.bf16.msra.mxu0 0
    %132 = vmatprep.subr.bf16.mxu0 0
    %133 = vmatpush1.bf16.msra.mxu0 0
    %134 = vmatprep.subr.bf16.mxu0 0
    %135 = vmatpush1.bf16.msra.mxu0 0
    %136 = vmatprep.subr.bf16.mxu0 0
    %137 = vmatpush1.bf16.msra.mxu0 0
    %138 = vmatprep.subr.bf16.mxu0 0
    %139 = vmatpush1.bf16.msra.mxu0 0
    %140 = vmatprep.subr.bf16.mxu0 0
    %141 = vmatpush1.bf16.msra.mxu0 0
    %142 = vmatprep.subr.bf16.mxu0 0
    %143 = vmatpush1.bf16.msra.mxu0 0
    %144 = vmatprep.subr.bf16.mxu0 0
    %145 = vmatpush1.bf16.msra.mxu0 0
    %146 = vmatprep.subr.bf16.mxu0 0
    %147 = vmatpush1.bf16.msra.mxu0 0
    %148 = vmatprep.subr.bf16.mxu0 0
    %149 = vmatpush1.bf16.msra.mxu0 0
    %150 = vmatprep.subr.bf16.mxu0 0
    %151 = vmatpush1.bf16.msra.mxu0 0
    %152 = vmatprep.subr.bf16.mxu0 0
    %153 = vmatpush1.bf16.msra.mxu0 0
    %154 = vmatprep.subr.bf16.mxu0 0
    %155 = vmatpush1.bf16.msra.mxu0 0
    %156 = vmatprep.mubr.bf16.mxu0 0
    %157 = vmatmul.mubr.bf16.gmra.mrb[0].mxu0 %v118
    %v158 = vpop.f32.mrb[0].mxu0
    %v159 = vadd.f32 0.0, %v158
    %v160 = vpop.f32.mrb[0].mxu0
    %v161 = vpop.f32.mrb[0].mxu0
    %v162 = vadd.f32 0.0, %v161
    %v163 = vpop.f32.mrb[0].mxu0
    %164 = vdwg.mxu0
    %v167 = vunpack.c.l.b16 %v113
    %v168 = vunpack.c.l.b16 %v114
    %v169 = vpack.c.b16 %v168, %v167
    %vm171 = vcmask 130048
    %v173 = vsel %vm171, %v109, 0
    %175 = vmatprep.subr.bf16.mxu0 0
    %176 = vmatpush1.bf16.msra.mxu0 %v169
    %177 = vmatprep.subr.bf16.mxu0 0
    %178 = vmatpush1.bf16.msra.mxu0 0
    %179 = vmatprep.subr.bf16.mxu0 0
    %180 = vmatpush1.bf16.msra.mxu0 0
    %181 = vmatprep.subr.bf16.mxu0 0
    %182 = vmatpush1.bf16.msra.mxu0 0
    %183 = vmatprep.subr.bf16.mxu0 0
    %184 = vmatpush1.bf16.msra.mxu0 0
    %185 = vmatprep.subr.bf16.mxu0 0
    %186 = vmatpush1.bf16.msra.mxu0 0
    %187 = vmatprep.subr.bf16.mxu0 0
    %188 = vmatpush1.bf16.msra.mxu0 0
    %189 = vmatprep.subr.bf16.mxu0 0
    %190 = vmatpush1.bf16.msra.mxu0 0
    %191 = vmatprep.subr.bf16.mxu0 0
    %192 = vmatpush1.bf16.msra.mxu0 0
    %193 = vmatprep.subr.bf16.mxu0 0
    %194 = vmatpush1.bf16.msra.mxu0 0
    %195 = vmatprep.subr.bf16.mxu0 0
    %196 = vmatpush1.bf16.msra.mxu0 0
    %197 = vmatprep.subr.bf16.mxu0 0
    %198 = vmatpush1.bf16.msra.mxu0 0
    %199 = vmatprep.subr.bf16.mxu0 0
    %200 = vmatpush1.bf16.msra.mxu0 0
    %201 = vmatprep.subr.bf16.mxu0 0
    %202 = vmatpush1.bf16.msra.mxu0 0
    %203 = vmatprep.subr.bf16.mxu0 0
    %204 = vmatpush1.bf16.msra.mxu0 0
    %205 = vmatprep.subr.bf16.mxu0 0
    %206 = vmatpush1.bf16.msra.mxu0 0
    %207 = vmatprep.mubr.bf16.mxu0 0
    %208 = vmatmul.mubr.bf16.gmra.mrb[0].mxu0 %v173
    %v209 = vpop.f32.mrb[0].mxu0
    %v210 = vadd.f32 %v159, %v209
    %v211 = vpop.f32.mrb[0].mxu0
    %v212 = vpop.f32.mrb[0].mxu0
    %v213 = vadd.f32 %v162, %v212
    %v214 = vpop.f32.mrb[0].mxu0
    %215 = vdwg.mxu0
    %v216 = vld [vmem:[#allocation6] sm:$0x1]
    %v218 = vlaneseq
    %v219 = vshrl.u32 %v218, 7
    %v220 = vsub.s32 0, %v219
    %v221 = vrot.slane %v216, %v220
    %v223 = vadd.f32 %v210, %v221
    %v224 = vadd.f32 %v213, %v221
    %v225 = vmax.f32 %v223, 0.0
    %v226 = vmax.f32 %v224, 0.0
    %v227 = vpack.c.bf16 %v226, %v225
    %v228 = vld [vmem:[%s5] sm:$0xf]
    %v229 = vld [vmem:[%s5 + $0x4] sm:$0xf]
    %v230 = vld [vmem:[%s5 + $0x8] sm:$0xf]
    %v231 = vld [vmem:[%s5 + $0xc] sm:$0xf]
    %v232 = vld [vmem:[%s5 + $0x10] sm:$0xf]
    %v233 = vld [vmem:[%s5 + $0x14] sm:$0xf]
    %v234 = vld [vmem:[%s5 + $0x18] sm:$0xf]
    %v235 = vld [vmem:[%s5 + $0x1c] sm:$0xf]
    %v236 = vld [vmem:[%s5 + $0x20] sm:$0xf]
    %v237 = vld [vmem:[%s5 + $0x24] sm:$0xf]
    %v238 = vld [vmem:[%s5 + $0x28] sm:$0xf]
    %v239 = vld [vmem:[%s5 + $0x2c] sm:$0xf]
    %v240 = vld [vmem:[%s5 + $0x30] sm:$0xf]
    %v241 = vld [vmem:[%s5 + $0x34] sm:$0xf]
    %v242 = vld [vmem:[%s5 + $0x38] sm:$0xf]
    %v243 = vld [vmem:[%s5 + $0x3c] sm:$0xf]
    %v244 = vld [vmem:[#allocation7] sm:$0x1]
    %v246 = vlaneseq
    %v247 = vshrl.u32 %v246, 7
    %v248 = vsub.s32 0, %v247
    %v249 = vrot.slane %v244, %v248
    %v267 = vunpack.c.l.b16 %v228
    %v268 = vunpack.c.l.b16 %v229
    %v269 = vunpack.c.l.b16 %v230
    %v270 = vunpack.c.l.b16 %v231
    %v271 = vunpack.c.l.b16 %v232
    %v272 = vunpack.c.l.b16 %v233
    %v273 = vunpack.c.l.b16 %v234
    %v274 = vunpack.c.l.b16 %v235
    %v275 = vunpack.c.l.b16 %v236
    %v276 = vunpack.c.l.b16 %v237
    %v277 = vunpack.c.l.b16 %v238
    %v278 = vunpack.c.l.b16 %v239
    %v279 = vunpack.c.l.b16 %v240
    %v280 = vunpack.c.l.b16 %v241
    %v281 = vunpack.c.l.b16 %v242
    %v282 = vunpack.c.l.b16 %v243
    %v283 = vpack.c.b16 %v268, %v267
    %v284 = vpack.c.b16 %v270, %v269
    %v285 = vpack.c.b16 %v272, %v271
    %v286 = vpack.c.b16 %v274, %v273
    %v287 = vpack.c.b16 %v276, %v275
    %v288 = vpack.c.b16 %v278, %v277
    %v289 = vpack.c.b16 %v280, %v279
    %v290 = vpack.c.b16 %v282, %v281
    %299 = vmatprep.subr.bf16.mxu0 0
    %300 = vmatpush1.bf16.msra.mxu0 %v283
    %301 = vmatprep.subr.bf16.mxu0 0
    %302 = vmatpush1.bf16.msra.mxu0 %v284
    %303 = vmatprep.subr.bf16.mxu0 0
    %304 = vmatpush1.bf16.msra.mxu0 %v285
    %305 = vmatprep.subr.bf16.mxu0 0
    %306 = vmatpush1.bf16.msra.mxu0 %v286
    %307 = vmatprep.subr.bf16.mxu0 0
    %308 = vmatpush1.bf16.msra.mxu0 %v287
    %309 = vmatprep.subr.bf16.mxu0 0
    %310 = vmatpush1.bf16.msra.mxu0 %v288
    %311 = vmatprep.subr.bf16.mxu0 0
    %312 = vmatpush1.bf16.msra.mxu0 %v289
    %313 = vmatprep.subr.bf16.mxu0 0
    %314 = vmatpush1.bf16.msra.mxu0 %v290
    %315 = vmatprep.subr.bf16.mxu0 0
    %316 = vmatpush1.bf16.msra.mxu0 0
    %317 = vmatprep.subr.bf16.mxu0 0
    %318 = vmatpush1.bf16.msra.mxu0 0
    %319 = vmatprep.subr.bf16.mxu0 0
    %320 = vmatpush1.bf16.msra.mxu0 0
    %321 = vmatprep.subr.bf16.mxu0 0
    %322 = vmatpush1.bf16.msra.mxu0 0
    %323 = vmatprep.subr.bf16.mxu0 0
    %324 = vmatpush1.bf16.msra.mxu0 0
    %325 = vmatprep.subr.bf16.mxu0 0
    %326 = vmatpush1.bf16.msra.mxu0 0
    %327 = vmatprep.subr.bf16.mxu0 0
    %328 = vmatpush1.bf16.msra.mxu0 0
    %329 = vmatprep.subr.bf16.mxu0 0
    %330 = vmatpush1.bf16.msra.mxu0 0
    %331 = vmatprep.mubr.bf16.mxu0 0
    %332 = vmatmul.mubr.bf16.gmra.mrb[0].mxu0 %v227
    %v333 = vpop.f32.mrb[0].mxu0
    %v334 = vadd.f32 %v249, %v333
    %v335 = vpop.f32.mrb[0].mxu0
    %v336 = vpop.f32.mrb[0].mxu0
    %v337 = vadd.f32 %v249, %v336
    %v338 = vpop.f32.mrb[0].mxu0
    %339 = vdwg.mxu0
    %v340 = vmax.f32 %v334, 0.0
    %v341 = vmax.f32 %v337, 0.0
    %v342 = vpack.c.bf16 %v341, %v340
    %v343 = vld [vmem:[#allocation9] sm:$0xf]
    %v344 = vld [vmem:[#allocation9 + $0x4] sm:$0xf]
    %v345 = vld [vmem:[#allocation9 + $0x8] sm:$0xf]
    %v346 = vld [vmem:[#allocation9 + $0xc] sm:$0xf]
    %v347 = vld [vmem:[#allocation9 + $0x10] sm:$0xf]
    %v348 = vld [vmem:[#allocation9 + $0x14] sm:$0xf]
    %v349 = vld [vmem:[#allocation9 + $0x18] sm:$0xf]
    %v350 = vld [vmem:[#allocation9 + $0x1c] sm:$0xf]
    %v351 = vld [vmem:[#allocation9 + $0x20] sm:$0xf]
    %v352 = vld [vmem:[#allocation9 + $0x24] sm:$0xf]
    %v353 = vld [vmem:[#allocation9 + $0x28] sm:$0xf]
    %v354 = vld [vmem:[#allocation9 + $0x2c] sm:$0xf]
    %v355 = vld [vmem:[#allocation9 + $0x30] sm:$0xf]
    %v356 = vld [vmem:[#allocation9 + $0x34] sm:$0xf]
    %v357 = vld [vmem:[#allocation9 + $0x38] sm:$0xf]
    %v358 = vld [vmem:[#allocation9 + $0x3c] sm:$0xf]
    %v359 = vld [vmem:[#allocation10] sm:$0x1]
    %v361 = vlaneseq
    %v362 = vshrl.u32 %v361, 7
    %v363 = vsub.s32 0, %v362
    %v364 = vrot.slane %v359, %v363
    %v382 = vunpack.c.l.b16 %v343
    %v383 = vunpack.c.l.b16 %v344
    %v384 = vunpack.c.l.b16 %v345
    %v385 = vunpack.c.l.b16 %v346
    %v386 = vunpack.c.l.b16 %v347
    %v387 = vunpack.c.l.b16 %v348
    %v388 = vunpack.c.l.b16 %v349
    %v389 = vunpack.c.l.b16 %v350
    %v390 = vunpack.c.l.b16 %v351
    %v391 = vunpack.c.l.b16 %v352
    %v392 = vunpack.c.l.b16 %v353
    %v393 = vunpack.c.l.b16 %v354
    %v394 = vunpack.c.l.b16 %v355
    %v395 = vunpack.c.l.b16 %v356
    %v396 = vunpack.c.l.b16 %v357
    %v397 = vunpack.c.l.b16 %v358
    %v398 = vpack.c.b16 %v383, %v382
    %v399 = vpack.c.b16 %v385, %v384
    %v400 = vpack.c.b16 %v387, %v386
    %v401 = vpack.c.b16 %v389, %v388
    %v402 = vpack.c.b16 %v391, %v390
    %v403 = vpack.c.b16 %v393, %v392
    %v404 = vpack.c.b16 %v395, %v394
    %v405 = vpack.c.b16 %v397, %v396
    %414 = vmatprep.subr.bf16.mxu0 0
    %415 = vmatpush1.bf16.msra.mxu0 %v398
    %416 = vmatprep.subr.bf16.mxu0 0
    %417 = vmatpush1.bf16.msra.mxu0 %v399
    %418 = vmatprep.subr.bf16.mxu0 0
    %419 = vmatpush1.bf16.msra.mxu0 %v400
    %420 = vmatprep.subr.bf16.mxu0 0
    %421 = vmatpush1.bf16.msra.mxu0 %v401
    %422 = vmatprep.subr.bf16.mxu0 0
    %423 = vmatpush1.bf16.msra.mxu0 %v402
    %424 = vmatprep.subr.bf16.mxu0 0
    %425 = vmatpush1.bf16.msra.mxu0 %v403
    %426 = vmatprep.subr.bf16.mxu0 0
    %427 = vmatpush1.bf16.msra.mxu0 %v404
    %428 = vmatprep.subr.bf16.mxu0 0
    %429 = vmatpush1.bf16.msra.mxu0 %v405
    %430 = vmatprep.subr.bf16.mxu0 0
    %431 = vmatpush1.bf16.msra.mxu0 0
    %432 = vmatprep.subr.bf16.mxu0 0
    %433 = vmatpush1.bf16.msra.mxu0 0
    %434 = vmatprep.subr.bf16.mxu0 0
    %435 = vmatpush1.bf16.msra.mxu0 0
    %436 = vmatprep.subr.bf16.mxu0 0
    %437 = vmatpush1.bf16.msra.mxu0 0
    %438 = vmatprep.subr.bf16.mxu0 0
    %439 = vmatpush1.bf16.msra.mxu0 0
    %440 = vmatprep.subr.bf16.mxu0 0
    %441 = vmatpush1.bf16.msra.mxu0 0
    %442 = vmatprep.subr.bf16.mxu0 0
    %443 = vmatpush1.bf16.msra.mxu0 0
    %444 = vmatprep.subr.bf16.mxu0 0
    %445 = vmatpush1.bf16.msra.mxu0 0
    %446 = vmatprep.mubr.bf16.mxu0 0
    %447 = vmatmul.mubr.bf16.gmra.mrb[0].mxu0 %v342
    %v448 = vpop.f32.mrb[0].mxu0
    %v449 = vadd.f32 %v364, %v448
    %v450 = vpop.f32.mrb[0].mxu0
    %v451 = vpop.f32.mrb[0].mxu0
    %v452 = vadd.f32 %v364, %v451
    %v453 = vpop.f32.mrb[0].mxu0
    %454 = vdwg.mxu0
    %455 = vst [vmem:[%s9] sm:$0xff] %v449
    %456 = vst [vmem:[%s9 + $0x8] sm:$0xff] %v452
    // Predicated region
    $region62: #{qfunction_forward.1} parent=1 // pred_check
      _
    $region63: #{qfunction_forward.1} parent=1 // pred_check_branch
      %458 = sbr.rel (0) target = $region65
    $region64: #{qfunction_forward.1} parent=1 // pred_region
      _
    $region65: #{qfunction_forward.1} parent=1 // pred_fallthru
      _
    // Predicated region
    $region66: #{qfunction_forward.1} parent=1 // pred_check
      _
    $region67: #{qfunction_forward.1} parent=1 // pred_check_branch
      %460 = sbr.rel (0) target = $region69
    $region68: #{qfunction_forward.1} parent=1 // pred_region
      _
    $region69: #{qfunction_forward.1} parent=1 // pred_fallthru
      _
    %461 = vsyncpa [#allocation3], 1
    %462 = vsyncpa [#allocation5], 1
    %463 = vsyncpa [#allocation8], 1
    %464 = vsyncpa [#allocation11], 1

</llo_original>
